<compile_context>
chip_gen: v6e
topology: v6e:2x2x1
jax: 0.10.0
libtpu: 0.0.40
codegen_flags: <defaults>
</compile_context>

<pallas_src>
import functools

import jax
import jax.numpy as jnp
from jax.experimental import pallas as pl
from jax.experimental.pallas import tpu as pltpu


def _round_up(x, m):
    return ((x + m - 1) // m) * m


def _eann_kernel(x_ref, w1_ref, wcd_ref, wd2p_ref, bias_ref,
                 class_ref, domain_ref, *, hidden, class_num, event_num):
    x = x_ref[...]

    # packed biases: row 0 = b1, row 1 = [bc | bd1], row 2 = bd2
    b1 = bias_ref[0:1, :hidden]
    bcd = bias_ref[1:2, :class_num + hidden]
    bd2 = bias_ref[2:3, :event_num]

    # shared trunk: Linear(in_dim -> hidden) + F.leaky_relu (slope 0.01)
    h = jnp.dot(x, w1_ref[...], preferred_element_type=jnp.float32) + b1
    h = jnp.where(h > 0, h, 0.01 * h)

    # fused head stage: ONE MXU pass -> [class_logits | d_fc1 output]
    cd = jnp.dot(h, wcd_ref[...], preferred_element_type=jnp.float32) + bcd

    # class head: Softmax(dim=1) over the first class_num lanes
    lc = cd[:, :class_num]
    lc = lc - jnp.max(lc, axis=-1, keepdims=True)
    ec = jnp.exp(lc)
    class_ref[...] = (ec * pl.reciprocal(jnp.sum(ec, axis=-1, keepdims=True))
                      ).astype(class_ref.dtype)

    # domain head: grad_reverse is identity in forward; nn.LeakyReLU(True)
    # has negative_slope == 1.0 -> identity (reproduced exactly).
    # TODO(synk): if the author meant inplace=True (slope 0.01), apply
    #             jnp.where(d > 0, d, 0.01 * d) to cd[:, class_num:] here.
    # wd2p has zero rows for the class lanes, so feeding the full `cd`
    # contributes exact zeros for them — no lane slice / rotation needed.
    ld = jnp.dot(cd, wd2p_ref[...], preferred_element_type=jnp.float32) + bd2
    ld = ld - jnp.max(ld, axis=-1, keepdims=True)
    ed = jnp.exp(ld)
    domain_ref[...] = (ed * pl.reciprocal(jnp.sum(ed, axis=-1, keepdims=True))
                       ).astype(domain_ref.dtype)


def pack_params(params):
    """One-time parameter packing (hoisted out of the per-call path).

    Fuses the class head and domain d_fc1 into one weight/bias, zero-row-pads
    wd2 so the final matmul consumes the fused activation directly, and packs
    all biases into a single [3, 128k] tile (1 DMA instead of 4)."""
    hidden = params["w1"].shape[1]
    class_num = params["wc"].shape[1]
    event_num = params["wd2"].shape[1]

    wcd = jnp.concatenate([params["wc"], params["wd1"]], axis=1)          # [H, C+H]
    bcd = jnp.concatenate([params["bc"], params["bd1"]], axis=1)          # [1, C+H]
    wd2p = jnp.concatenate(
        [jnp.zeros((class_num, event_num), params["wd2"].dtype), params["wd2"]],
        axis=0)                                                           # [C+H, E]

    bias_w = _round_up(max(hidden, class_num + hidden, event_num), 128)

    def _row(v):
        return jnp.pad(v, ((0, 0), (0, bias_w - v.shape[1])))

    bias_pack = jnp.concatenate(
        [_row(params["b1"]), _row(bcd), _row(params["bd2"])],
        axis=0).astype(jnp.float32)                                       # [3, bias_w]

    return {
        "w1": params["w1"],
        "wcd": wcd,
        "wd2p": wd2p,
        "bias": bias_pack,
        "dims": (hidden, class_num, event_num),
    }


def eann_forward(x, packed, *, max_tb=4096):
    """x: [bs, in_dim] f32. packed: output of pack_params().

    Returns (class_out [bs, class_num], domain_out [bs, event_num])."""
    bs, in_dim = x.shape
    hidden, class_num, event_num = packed["dims"]
    bias_w = packed["bias"].shape[1]

    # Large fixed batch tile (multiple of 8) + cdiv grid: amortizes the
    # ~0.35us per-step overhead and never falls back to tiny tiles for
    # ragged batch sizes.  Tail block reads are padded, tail writes dropped.
    tb = max(8, min(max_tb, _round_up(bs, 8)))
    grid = (pl.cdiv(bs, tb),)

    kernel = functools.partial(
        _eann_kernel, hidden=hidden, class_num=class_num, event_num=event_num)

    class_out, domain_out = pl.pallas_call(
        kernel,
        out_shape=(jax.ShapeDtypeStruct((bs, class_num), jnp.float32),
                   jax.ShapeDtypeStruct((bs, event_num), jnp.float32)),
        grid=grid,
        in_specs=[
            pl.BlockSpec((tb, in_dim), lambda i: (i, 0)),                    # x (pipelined)
            pl.BlockSpec((in_dim, hidden), lambda i: (0, 0)),                # w1 (resident)
            pl.BlockSpec((hidden, class_num + hidden), lambda i: (0, 0)),    # [wc|wd1]
            pl.BlockSpec((class_num + hidden, event_num), lambda i: (0, 0)), # wd2 (zero-padded)
            pl.BlockSpec((3, bias_w), lambda i: (0, 0)),                     # packed biases
        ],
        out_specs=(
            pl.BlockSpec((tb, class_num), lambda i: (i, 0)),
            pl.BlockSpec((tb, event_num), lambda i: (i, 0)),
        ),
        compiler_params=pltpu.CompilerParams(
            dimension_semantics=("parallel",)),
    )(x, packed["w1"], packed["wcd"], packed["wd2p"], packed["bias"])

    return class_out, domain_out


def init_params(key, in_dim, hidden, class_num, event_num):
    """Deterministic synthetic init mirroring the PyTorch layer shapes.
    Weights are stored transposed ([in, out]) so the kernel does x @ W + b.
    Biases are stored as [1, out]."""
    ks = jax.random.split(key, 4)
    std = 0.02
    return {
        "w1":  jax.random.normal(ks[0], (in_dim, hidden), jnp.float32) * std,
        "b1":  jnp.zeros((1, hidden), jnp.float32),
        "wc":  jax.random.normal(ks[1], (hidden, class_num), jnp.float32) * std,
        "bc":  jnp.zeros((1, class_num), jnp.float32),
        "wd1": jax.random.normal(ks[2], (hidden, hidden), jnp.float32) * std,
        "bd1": jnp.zeros((1, hidden), jnp.float32),
        "wd2": jax.random.normal(ks[3], (hidden, event_num), jnp.float32) * std,
        "bd2": jnp.zeros((1, event_num), jnp.float32),
    }


def eann_ref(x, p):
    """Pure-JAX reference for correctness check (unfused, per-layer math)."""
    h = x @ p["w1"] + p["b1"]
    h = jnp.where(h > 0, h, 0.01 * h)
    c = jax.nn.softmax(h @ p["wc"] + p["bc"], axis=1)
    d = h @ p["wd1"] + p["bd1"]          # LeakyReLU(True) == identity
    dm = jax.nn.softmax(d @ p["wd2"] + p["bd2"], axis=1)
    return c, dm


if __name__ == "__main__":
    # args: in_dim=256 (text[bs,256] flat), hidden_dim=32, class_num=2, event_num=10
    in_dim, hidden, class_num, event_num = 256, 32, 2, 10

    key = jax.random.PRNGKey(0)
    kx, kp, kx2 = jax.random.split(key, 3)
    params = init_params(kp, in_dim, hidden, class_num, event_num)
    packed = pack_params(params)          # one-time packing, reused across calls

    # --- test 1: small aligned batch ---
    bs = 8
    x = jax.random.normal(kx, (bs, in_dim), jnp.float32)
    class_out, domain_out = eann_forward(x, packed)
    jax.block_until_ready((class_out, domain_out))

    c_ref, d_ref = eann_ref(x, params)
    assert class_out.shape == (bs, class_num)
    assert domain_out.shape == (bs, event_num)
    assert jnp.allclose(class_out, c_ref, atol=1e-5, rtol=1e-5)
    assert jnp.allclose(domain_out, d_ref, atol=1e-5, rtol=1e-5)
    assert jnp.allclose(jnp.sum(class_out, axis=1), 1.0, atol=1e-5)
    assert jnp.allclose(jnp.sum(domain_out, axis=1), 1.0, atol=1e-5)

    # --- test 2: ragged batch exercising the cdiv grid / masked tail writes ---
    bs2 = 20
    x2 = jax.random.normal(kx2, (bs2, in_dim), jnp.float32)
    c2, d2 = eann_forward(x2, packed)
    jax.block_until_ready((c2, d2))
    c2_ref, d2_ref = eann_ref(x2, params)
    assert jnp.allclose(c2, c2_ref, atol=1e-5, rtol=1e-5)
    assert jnp.allclose(d2, d2_ref, atol=1e-5, rtol=1e-5)

    print("KERNEL_OK")
</pallas_src>

<mosaic_0001>
module attributes {stable_mosaic.version = 11 : i64} {
  func.func @_eann_kernel(%arg0: i32, %arg1: memref<8x256xf32, #tpu.memory_space<vmem>>, %arg2: memref<256x32xf32, #tpu.memory_space<vmem>>, %arg3: memref<32x34xf32, #tpu.memory_space<vmem>>, %arg4: memref<34x10xf32, #tpu.memory_space<vmem>>, %arg5: memref<3x128xf32, #tpu.memory_space<vmem>>, %arg6: memref<8x2xf32, #tpu.memory_space<vmem>>, %arg7: memref<8x10xf32, #tpu.memory_space<vmem>>) attributes {dimension_semantics = [#tpu.dimension_semantics<parallel>], iteration_bounds = array<i64: 1>, scalar_prefetch = 0 : i64, scratch_operands = 0 : i64, tpu.core_type = #tpu.core_type<tc>, window_params = [{transform_indices = @transform_0, window_bounds = array<i64: 8, 256>}, {pipeline_mode = #tpu.pipeline_mode<synchronous>, transform_indices = @transform_1, window_bounds = array<i64: 256, 32>}, {pipeline_mode = #tpu.pipeline_mode<synchronous>, transform_indices = @transform_2, window_bounds = array<i64: 32, 34>}, {pipeline_mode = #tpu.pipeline_mode<synchronous>, transform_indices = @transform_3, window_bounds = array<i64: 34, 10>}, {pipeline_mode = #tpu.pipeline_mode<synchronous>, transform_indices = @transform_4, window_bounds = array<i64: 3, 128>}, {transform_indices = @transform_5, window_bounds = array<i64: 8, 2>}, {transform_indices = @transform_6, window_bounds = array<i64: 8, 10>}]} {
    %c0 = arith.constant 0 : index
    %c0_0 = arith.constant 0 : index
    %0 = vector.load %arg1[%c0, %c0_0] : memref<8x256xf32, #tpu.memory_space<vmem>>, vector<8x256xf32>
    %c0_1 = arith.constant 0 : index
    %c0_2 = arith.constant 0 : index
    %1 = vector.load %arg5[%c0_1, %c0_2] : memref<3x128xf32, #tpu.memory_space<vmem>>, vector<1x32xf32>
    %c1 = arith.constant 1 : index
    %c0_3 = arith.constant 0 : index
    %2 = vector.load %arg5[%c1, %c0_3] : memref<3x128xf32, #tpu.memory_space<vmem>>, vector<1x34xf32>
    %c2 = arith.constant 2 : index
    %c0_4 = arith.constant 0 : index
    %3 = vector.load %arg5[%c2, %c0_4] : memref<3x128xf32, #tpu.memory_space<vmem>>, vector<1x10xf32>
    %c0_5 = arith.constant 0 : index
    %c0_6 = arith.constant 0 : index
    %4 = vector.load %arg2[%c0_5, %c0_6] : memref<256x32xf32, #tpu.memory_space<vmem>>, vector<256x32xf32>
    %cst = arith.constant dense<0.000000e+00> : vector<8x32xf32>
    %5 = tpu.matmul %0, %4, %cst {dimension_numbers = #tpu.dot_dimension_numbers<[1], [0], [0], [1], [0, 0, 1, 1], [], []>} : vector<8x256xf32>, vector<256x32xf32>, vector<8x32xf32> -> vector<8x32xf32>
    %6 = vector.broadcast %1 : vector<1x32xf32> to vector<8x32xf32>
    %7 = arith.addf %5, %6 : vector<8x32xf32>
    %cst_7 = arith.constant 0.000000e+00 : f32
    %8 = vector.broadcast %cst_7 : f32 to vector<8x32xf32>
    %9 = arith.cmpf ogt, %7, %8 : vector<8x32xf32>
    %cst_8 = arith.constant 0.00999999977 : f32
    %10 = vector.broadcast %cst_8 : f32 to vector<8x32xf32>
    %11 = arith.mulf %10, %7 : vector<8x32xf32>
    %12 = arith.select %9, %7, %11 : vector<8x32xi1>, vector<8x32xf32>
    %c0_9 = arith.constant 0 : index
    %c0_10 = arith.constant 0 : index
    %13 = vector.load %arg3[%c0_9, %c0_10] : memref<32x34xf32, #tpu.memory_space<vmem>>, vector<32x34xf32>
    %cst_11 = arith.constant dense<0.000000e+00> : vector<8x34xf32>
    %14 = tpu.matmul %12, %13, %cst_11 {dimension_numbers = #tpu.dot_dimension_numbers<[1], [0], [0], [1], [0, 0, 1, 1], [], []>} : vector<8x32xf32>, vector<32x34xf32>, vector<8x34xf32> -> vector<8x34xf32>
    %15 = vector.broadcast %2 : vector<1x34xf32> to vector<8x34xf32>
    %16 = arith.addf %14, %15 : vector<8x34xf32>
    %17 = vector.extract_strided_slice %16 {offsets = [0, 0], sizes = [8, 2], strides = [1, 1]} : vector<8x34xf32> to vector<8x2xf32>
    %cst_12 = arith.constant dense<0xFF800000> : vector<8xf32>
    %18 = vector.multi_reduction <maximumf>, %17, %cst_12 [1] : vector<8x2xf32> to vector<8xf32>
    %19 = vector.shape_cast %18 : vector<8xf32> to vector<8x1xf32>
    %20 = vector.broadcast %19 : vector<8x1xf32> to vector<8x2xf32>
    %21 = arith.subf %17, %20 : vector<8x2xf32>
    %22 = math.exp %21 : vector<8x2xf32>
    %cst_13 = arith.constant dense<0.000000e+00> : vector<8xf32>
    %23 = vector.multi_reduction <add>, %22, %cst_13 [1] : vector<8x2xf32> to vector<8xf32>
    %24 = vector.shape_cast %23 : vector<8xf32> to vector<8x1xf32>
    %25 = tpu.reciprocal %24 : vector<8x1xf32> -> vector<8x1xf32>
    %26 = vector.broadcast %25 : vector<8x1xf32> to vector<8x2xf32>
    %27 = arith.mulf %22, %26 : vector<8x2xf32>
    %c0_14 = arith.constant 0 : index
    %c0_15 = arith.constant 0 : index
    %28 = vector.load %arg6[%c0_14, %c0_15] : memref<8x2xf32, #tpu.memory_space<vmem>>, vector<8x2xf32>
    tpu.vector_store %arg6[%c0_14, %c0_15], %27 {strides = array<i32>} : memref<8x2xf32, #tpu.memory_space<vmem>>, vector<8x2xf32>,
    %c0_16 = arith.constant 0 : index
    %c0_17 = arith.constant 0 : index
    %29 = vector.load %arg4[%c0_16, %c0_17] : memref<34x10xf32, #tpu.memory_space<vmem>>, vector<34x10xf32>
    %cst_18 = arith.constant dense<0.000000e+00> : vector<8x10xf32>
    %30 = tpu.matmul %16, %29, %cst_18 {dimension_numbers = #tpu.dot_dimension_numbers<[1], [0], [0], [1], [0, 0, 1, 1], [], []>} : vector<8x34xf32>, vector<34x10xf32>, vector<8x10xf32> -> vector<8x10xf32>
    %31 = vector.broadcast %3 : vector<1x10xf32> to vector<8x10xf32>
    %32 = arith.addf %30, %31 : vector<8x10xf32>
    %cst_19 = arith.constant dense<0xFF800000> : vector<8xf32>
    %33 = vector.multi_reduction <maximumf>, %32, %cst_19 [1] : vector<8x10xf32> to vector<8xf32>
    %34 = vector.shape_cast %33 : vector<8xf32> to vector<8x1xf32>
    %35 = vector.broadcast %34 : vector<8x1xf32> to vector<8x10xf32>
    %36 = arith.subf %32, %35 : vector<8x10xf32>
    %37 = math.exp %36 : vector<8x10xf32>
    %cst_20 = arith.constant dense<0.000000e+00> : vector<8xf32>
    %38 = vector.multi_reduction <add>, %37, %cst_20 [1] : vector<8x10xf32> to vector<8xf32>
    %39 = vector.shape_cast %38 : vector<8xf32> to vector<8x1xf32>
    %40 = tpu.reciprocal %39 : vector<8x1xf32> -> vector<8x1xf32>
    %41 = vector.broadcast %40 : vector<8x1xf32> to vector<8x10xf32>
    %42 = arith.mulf %37, %41 : vector<8x10xf32>
    %c0_21 = arith.constant 0 : index
    %c0_22 = arith.constant 0 : index
    %43 = vector.load %arg7[%c0_21, %c0_22] : memref<8x10xf32, #tpu.memory_space<vmem>>, vector<8x10xf32>
    tpu.vector_store %arg7[%c0_21, %c0_22], %42 {strides = array<i32>} : memref<8x10xf32, #tpu.memory_space<vmem>>, vector<8x10xf32>,
    return
  }
  func.func @transform_0(%arg0: i32) -> (i32, i32) {
    %c0_i32 = arith.constant 0 : i32
    %c0_i32_0 = arith.constant 0 : i32
    return %arg0, %c0_i32 : i32, i32
  }
  func.func @transform_1(%arg0: i32) -> (i32, i32) {
    %c0_i32 = arith.constant 0 : i32
    %c0_i32_0 = arith.constant 0 : i32
    %c0_i32_1 = arith.constant 0 : i32
    return %c0_i32, %c0_i32_0 : i32, i32
  }
  func.func @transform_2(%arg0: i32) -> (i32, i32) {
    %c0_i32 = arith.constant 0 : i32
    %c0_i32_0 = arith.constant 0 : i32
    %c0_i32_1 = arith.constant 0 : i32
    return %c0_i32, %c0_i32_0 : i32, i32
  }
  func.func @transform_3(%arg0: i32) -> (i32, i32) {
    %c0_i32 = arith.constant 0 : i32
    %c0_i32_0 = arith.constant 0 : i32
    %c0_i32_1 = arith.constant 0 : i32
    return %c0_i32, %c0_i32_0 : i32, i32
  }
  func.func @transform_4(%arg0: i32) -> (i32, i32) {
    %c0_i32 = arith.constant 0 : i32
    %c0_i32_0 = arith.constant 0 : i32
    %c0_i32_1 = arith.constant 0 : i32
    return %c0_i32, %c0_i32_0 : i32, i32
  }
  func.func @transform_5(%arg0: i32) -> (i32, i32) {
    %c0_i32 = arith.constant 0 : i32
    %c0_i32_0 = arith.constant 0 : i32
    return %arg0, %c0_i32 : i32, i32
  }
  func.func @transform_6(%arg0: i32) -> (i32, i32) {
    %c0_i32 = arith.constant 0 : i32
    %c0_i32_0 = arith.constant 0 : i32
    return %arg0, %c0_i32 : i32, i32
  }
}

</mosaic_0001>

<llo_original>
// kernel: tpu_custom_call.1
$region0: #{tpu_custom_call.1}
  #allocation0 [shape = 'u32[]', space=smem, size = 0x4, offset = 0x4, fixed_abs, tag = 'smem constant byte address 0x4 - core index']
  #allocation1 [shape = 'u32[144,128]{1,0:T(1,128)}', space=vmem, size = 0x12000, scoped, tag = 'internal scratch']
  %s0 = inlined_call_operand.vmem [shape: f32[8,256], index: 0, kind: input, shape index: {}]
  %s1 = inlined_call_operand.vmem [shape: f32[256,32], index: 1, kind: input, shape index: {}]
  %s2 = inlined_call_operand.vmem [shape: f32[32,34], index: 2, kind: input, shape index: {}]
  %s3 = inlined_call_operand.vmem [shape: f32[34,10], index: 3, kind: input, shape index: {}]
  %s4 = inlined_call_operand.vmem [shape: f32[3,128], index: 4, kind: input, shape index: {}]
  %s5 = inlined_call_operand.vmem [shape: f32[8,2], index: 5, kind: output, shape index: {0}]
  %s6 = inlined_call_operand.hbm [shape: f32[8,10], index: 6, kind: output, shape index: {1}]
  %7 = xla_tuple %s5, %s6
  %s8 = sld [smem:[#allocation0]]
  $region38: #{tpu_custom_call.1} parent=0
    _
  %s10 = ssub.s32 1, %s8
  %s11 = scalar_select 0, %s10, %s8
  $region1: #{tpu_custom_call.1} parent=0
    #allocation2 [shape = 'u8[4096]{0}', space=vmem, size = 0x1000, scoped, tag = 'output window, operand 1, single buffered']
    #allocation3 [shape = 's32[1]{0}', space=sflag, size = 0x4, scoped, tag = 'scoped memory for tpu_custom_call.1']
    %12 = vsyncpa [#allocation3], 0
    // Predicated region
    $region2: #{tpu_custom_call.1} parent=1 // pred_check
      _
    $region3: #{tpu_custom_call.1} parent=1 // pred_check_branch
      %14 = sbr.rel (0) target = $region5
    $region4: #{tpu_custom_call.1} parent=1 // pred_region
      _
    $region5: #{tpu_custom_call.1} parent=1 // pred_fallthru
      _
    // Predicated region
    $region6: #{tpu_custom_call.1} parent=1 // pred_check
      _
    $region7: #{tpu_custom_call.1} parent=1 // pred_check_branch
      %16 = sbr.rel (0) target = $region9
    $region8: #{tpu_custom_call.1} parent=1 // pred_region
      _
    $region9: #{tpu_custom_call.1} parent=1 // pred_fallthru
      _
    // Predicated region
    $region10: #{tpu_custom_call.1} parent=1 // pred_check
      _
    $region11: #{tpu_custom_call.1} parent=1 // pred_check_branch
      %18 = sbr.rel (0) target = $region13
    $region12: #{tpu_custom_call.1} parent=1 // pred_region
      _
    $region13: #{tpu_custom_call.1} parent=1 // pred_fallthru
      _
    // Predicated region
    $region14: #{tpu_custom_call.1} parent=1 // pred_check
      _
    $region15: #{tpu_custom_call.1} parent=1 // pred_check_branch
      %20 = sbr.rel (0) target = $region17
    $region16: #{tpu_custom_call.1} parent=1 // pred_region
      _
    $region17: #{tpu_custom_call.1} parent=1 // pred_fallthru
      _
    // Predicated region
    $region18: #{tpu_custom_call.1} parent=1 // pred_check
      _
    $region19: #{tpu_custom_call.1} parent=1 // pred_check_branch
      %22 = sbr.rel (0) target = $region21
    $region20: #{tpu_custom_call.1} parent=1 // pred_region
      _
    $region21: #{tpu_custom_call.1} parent=1 // pred_fallthru
      _
    %v23 = vld [vmem:[%s0] sm:$0xff]
    %v24 = vld [vmem:[%s0 + $0x8] sm:$0xff]
    %v25 = vld [vmem:[%s4] sm:$0x1]
    %v26 = vld [vmem:[%s4 + $0x1] sm:$0x1]
    %v27 = vld [vmem:[%s4 + $0x2] sm:$0x1]
    %v28 = vld [vmem:[%s1] sm:$0xff]
    %v29 = vld [vmem:[%s1 + $0x8] sm:$0xff]
    %v30 = vld [vmem:[%s1 + $0x10] sm:$0xff]
    %v31 = vld [vmem:[%s1 + $0x18] sm:$0xff]
    %v32 = vld [vmem:[%s1 + $0x20] sm:$0xff]
    %v33 = vld [vmem:[%s1 + $0x28] sm:$0xff]
    %v34 = vld [vmem:[%s1 + $0x30] sm:$0xff]
    %v35 = vld [vmem:[%s1 + $0x38] sm:$0xff]
    %v36 = vld [vmem:[%s1 + $0x40] sm:$0xff]
    %v37 = vld [vmem:[%s1 + $0x48] sm:$0xff]
    %v38 = vld [vmem:[%s1 + $0x50] sm:$0xff]
    %v39 = vld [vmem:[%s1 + $0x58] sm:$0xff]
    %v40 = vld [vmem:[%s1 + $0x60] sm:$0xff]
    %v41 = vld [vmem:[%s1 + $0x68] sm:$0xff]
    %v42 = vld [vmem:[%s1 + $0x70] sm:$0xff]
    %v43 = vld [vmem:[%s1 + $0x78] sm:$0xff]
    %v44 = vld [vmem:[%s1 + $0x80] sm:$0xff]
    %v45 = vld [vmem:[%s1 + $0x88] sm:$0xff]
    %v46 = vld [vmem:[%s1 + $0x90] sm:$0xff]
    %v47 = vld [vmem:[%s1 + $0x98] sm:$0xff]
    %v48 = vld [vmem:[%s1 + $0xa0] sm:$0xff]
    %v49 = vld [vmem:[%s1 + $0xa8] sm:$0xff]
    %v50 = vld [vmem:[%s1 + $0xb0] sm:$0xff]
    %v51 = vld [vmem:[%s1 + $0xb8] sm:$0xff]
    %v52 = vld [vmem:[%s1 + $0xc0] sm:$0xff]
    %v53 = vld [vmem:[%s1 + $0xc8] sm:$0xff]
    %v54 = vld [vmem:[%s1 + $0xd0] sm:$0xff]
    %v55 = vld [vmem:[%s1 + $0xd8] sm:$0xff]
    %v56 = vld [vmem:[%s1 + $0xe0] sm:$0xff]
    %v57 = vld [vmem:[%s1 + $0xe8] sm:$0xff]
    %v58 = vld [vmem:[%s1 + $0xf0] sm:$0xff]
    %v59 = vld [vmem:[%s1 + $0xf8] sm:$0xff]
    %v60 = vlaneseq
    %v61 = vshrl.u32 %v60, 7
    %v62 = vsub.s32 0, %v61
    %v63 = vrot.slane %v25, %v62
    %64 = vmatprep.subr.mxu0 0.0
    %65 = vmatpush1.msra.mxu0 %v43
    %66 = vmatprep.subr.mxu0 0.0
    %67 = vmatpush1.msra.mxu0 %v42
    %68 = vmatprep.subr.mxu0 0.0
    %69 = vmatpush1.msra.mxu0 %v41
    %70 = vmatprep.subr.mxu0 0.0
    %71 = vmatpush1.msra.mxu0 %v40
    %72 = vmatprep.subr.mxu0 0.0
    %73 = vmatpush1.msra.mxu0 %v39
    %74 = vmatprep.subr.mxu0 0.0
    %75 = vmatpush1.msra.mxu0 %v38
    %76 = vmatprep.subr.mxu0 0.0
    %77 = vmatpush1.msra.mxu0 %v37
    %78 = vmatprep.subr.mxu0 0.0
    %79 = vmatpush1.msra.mxu0 %v36
    %80 = vmatprep.subr.mxu0 0.0
    %81 = vmatpush1.msra.mxu0 %v35
    %82 = vmatprep.subr.mxu0 0.0
    %83 = vmatpush1.msra.mxu0 %v34
    %84 = vmatprep.subr.mxu0 0.0
    %85 = vmatpush1.msra.mxu0 %v33
    %86 = vmatprep.subr.mxu0 0.0
    %87 = vmatpush1.msra.mxu0 %v32
    %88 = vmatprep.subr.mxu0 0.0
    %89 = vmatpush1.msra.mxu0 %v31
    %90 = vmatprep.subr.mxu0 0.0
    %91 = vmatpush1.msra.mxu0 %v30
    %92 = vmatprep.subr.mxu0 0.0
    %93 = vmatpush1.msra.mxu0 %v29
    %94 = vmatprep.subr.mxu0 0.0
    %95 = vmatpush1.msra.mxu0 %v28
    %96 = vmatprep.subr.mxu0 0.0
    %97 = vmatpush2.msra.mxu0 %v59
    %98 = vmatprep.subr.mxu0 0.0
    %99 = vmatpush2.msra.mxu0 %v58
    %100 = vmatprep.subr.mxu0 0.0
    %101 = vmatpush2.msra.mxu0 %v57
    %102 = vmatprep.subr.mxu0 0.0
    %103 = vmatpush2.msra.mxu0 %v56
    %104 = vmatprep.subr.mxu0 0.0
    %105 = vmatpush2.msra.mxu0 %v55
    %106 = vmatprep.subr.mxu0 0.0
    %107 = vmatpush2.msra.mxu0 %v54
    %108 = vmatprep.subr.mxu0 0.0
    %109 = vmatpush2.msra.mxu0 %v53
    %110 = vmatprep.subr.mxu0 0.0
    %111 = vmatpush2.msra.mxu0 %v52
    %112 = vmatprep.subr.mxu0 0.0
    %113 = vmatpush2.msra.mxu0 %v51
    %114 = vmatprep.subr.mxu0 0.0
    %115 = vmatpush2.msra.mxu0 %v50
    %116 = vmatprep.subr.mxu0 0.0
    %117 = vmatpush2.msra.mxu0 %v49
    %118 = vmatprep.subr.mxu0 0.0
    %119 = vmatpush2.msra.mxu0 %v48
    %120 = vmatprep.subr.mxu0 0.0
    %121 = vmatpush2.msra.mxu0 %v47
    %122 = vmatprep.subr.mxu0 0.0
    %123 = vmatpush2.msra.mxu0 %v46
    %124 = vmatprep.subr.mxu0 0.0
    %125 = vmatpush2.msra.mxu0 %v45
    %126 = vmatprep.subr.mxu0 0.0
    %127 = vmatpush2.msra.mxu0 %v44
    %128 = vmatprep.mubr.f32.mxu0 %v24
    %129 = vmatmul.mubr.f32.gmra.mxu0 %v23
    %v130 = vpop.f32.mrf.mxu0
    %v131 = vadd.f32 %v63, %v130
    %v132 = vpop.f32.mrf.mxu0
    %133 = vdwg.mxu0
    %vm134 = vcmp.gt.f32.partialorder %v131, 0.0
    %v135 = vmul.f32 %v131, 0.01
    %v136 = vsel %vm134, %v131, %v135
    %v137 = vld [vmem:[%s2] sm:$0xff]
    %v138 = vld [vmem:[%s2 + $0x8] sm:$0xff]
    %v139 = vld [vmem:[%s2 + $0x10] sm:$0xff]
    %v140 = vld [vmem:[%s2 + $0x18] sm:$0xff]
    %v141 = vlaneseq
    %v142 = vshrl.u32 %v141, 7
    %v143 = vsub.s32 0, %v142
    %v144 = vrot.slane %v26, %v143
    %vm145 = vcmask 261120
    %v147 = vsel %vm145, %v136, 0
    %149 = vmatprep.subr.mxu0 0.0
    %150 = vmatpush1.msra.mxu0 0.0
    %151 = vmatprep.subr.mxu0 0.0
    %152 = vmatpush1.msra.mxu0 0.0
    %153 = vmatprep.subr.mxu0 0.0
    %154 = vmatpush1.msra.mxu0 0.0
    %155 = vmatprep.subr.mxu0 0.0
    %156 = vmatpush1.msra.mxu0 0.0
    %157 = vmatprep.subr.mxu0 0.0
    %158 = vmatpush1.msra.mxu0 0.0
    %159 = vmatprep.subr.mxu0 0.0
    %160 = vmatpush1.msra.mxu0 0.0
    %161 = vmatprep.subr.mxu0 0.0
    %162 = vmatpush1.msra.mxu0 0.0
    %163 = vmatprep.subr.mxu0 0.0
    %164 = vmatpush1.msra.mxu0 0.0
    %165 = vmatprep.subr.mxu0 0.0
    %166 = vmatpush1.msra.mxu0 0.0
    %167 = vmatprep.subr.mxu0 0.0
    %168 = vmatpush1.msra.mxu0 0.0
    %169 = vmatprep.subr.mxu0 0.0
    %170 = vmatpush1.msra.mxu0 0.0
    %171 = vmatprep.subr.mxu0 0.0
    %172 = vmatpush1.msra.mxu0 0.0
    %173 = vmatprep.subr.mxu0 0.0
    %174 = vmatpush1.msra.mxu0 %v140
    %175 = vmatprep.subr.mxu0 0.0
    %176 = vmatpush1.msra.mxu0 %v139
    %177 = vmatprep.subr.mxu0 0.0
    %178 = vmatpush1.msra.mxu0 %v138
    %179 = vmatprep.subr.mxu0 0.0
    %180 = vmatpush1.msra.mxu0 %v137
    %181 = vmatprep.subr.mxu0 0.0
    %182 = vmatpush2.msra.mxu0 0.0
    %183 = vmatprep.subr.mxu0 0.0
    %184 = vmatpush2.msra.mxu0 0.0
    %185 = vmatprep.subr.mxu0 0.0
    %186 = vmatpush2.msra.mxu0 0.0
    %187 = vmatprep.subr.mxu0 0.0
    %188 = vmatpush2.msra.mxu0 0.0
    %189 = vmatprep.subr.mxu0 0.0
    %190 = vmatpush2.msra.mxu0 0.0
    %191 = vmatprep.subr.mxu0 0.0
    %192 = vmatpush2.msra.mxu0 0.0
    %193 = vmatprep.subr.mxu0 0.0
    %194 = vmatpush2.msra.mxu0 0.0
    %195 = vmatprep.subr.mxu0 0.0
    %196 = vmatpush2.msra.mxu0 0.0
    %197 = vmatprep.subr.mxu0 0.0
    %198 = vmatpush2.msra.mxu0 0.0
    %199 = vmatprep.subr.mxu0 0.0
    %200 = vmatpush2.msra.mxu0 0.0
    %201 = vmatprep.subr.mxu0 0.0
    %202 = vmatpush2.msra.mxu0 0.0
    %203 = vmatprep.subr.mxu0 0.0
    %204 = vmatpush2.msra.mxu0 0.0
    %205 = vmatprep.subr.mxu0 0.0
    %206 = vmatpush2.msra.mxu0 0.0
    %207 = vmatprep.subr.mxu0 0.0
    %208 = vmatpush2.msra.mxu0 0.0
    %209 = vmatprep.subr.mxu0 0.0
    %210 = vmatpush2.msra.mxu0 0.0
    %211 = vmatprep.subr.mxu0 0.0
    %212 = vmatpush2.msra.mxu0 0.0
    %213 = vmatprep.mubr.f32.mxu0 0.0
    %214 = vmatmul.mubr.f32.gmra.mxu0 %v147
    %v215 = vpop.f32.mrf.mxu0
    %v216 = vadd.f32 %v144, %v215
    %v217 = vpop.f32.mrf.mxu0
    %218 = vdwg.mxu0
    %vm219 = vcmask 15360
    %v220 = vsel %vm219, %v216, -inf
    %221 = vmax.xlane.f32.xlu0 %v220
    %v222 = vpop.xlane.xlu0 %221
    %v223 = vsub.f32 %v216, %v222
    %v224 = vmul.f32 %v223, 1.442695
    %v225 = vpow.pop %v224
    %v226 = vsel %vm219, %v225, 0.0
    %227 = vadd.xlane.f32.xlu0 %v226
    %v228 = vpop.xlane.xlu0 %227
    %v229 = vrcp.pop %v228
    %v230 = vmul.f32 %v225, %v229
    %231 = vst.msk [vmem:[%s5] sm:$0xff] %vm219, %v230
    %v232 = vld [vmem:[%s3] sm:$0xff]
    %v233 = vld [vmem:[%s3 + $0x8] sm:$0xff]
    %v234 = vld [vmem:[%s3 + $0x10] sm:$0xff]
    %v235 = vld [vmem:[%s3 + $0x18] sm:$0xff]
    %v236 = vld [vmem:[%s3 + $0x20] sm:$0x3]
    %v237 = vlaneseq
    %v238 = vshrl.u32 %v237, 7
    %v239 = vsub.s32 0, %v238
    %v240 = vrot.slane %v27, %v239
    %vm241 = vcmask 277504
    %v243 = vsel %vm241, %v216, 0
    %vm245 = vcmask 1041408
    %v247 = vsel %vm245, %v236, 0
    %249 = vmatprep.subr.mxu0 0.0
    %250 = vmatpush1.msra.mxu0 0.0
    %251 = vmatprep.subr.mxu0 0.0
    %252 = vmatpush1.msra.mxu0 0.0
    %253 = vmatprep.subr.mxu0 0.0
    %254 = vmatpush1.msra.mxu0 0.0
    %255 = vmatprep.subr.mxu0 0.0
    %256 = vmatpush1.msra.mxu0 0.0
    %257 = vmatprep.subr.mxu0 0.0
    %258 = vmatpush1.msra.mxu0 0.0
    %259 = vmatprep.subr.mxu0 0.0
    %260 = vmatpush1.msra.mxu0 0.0
    %261 = vmatprep.subr.mxu0 0.0
    %262 = vmatpush1.msra.mxu0 0.0
    %263 = vmatprep.subr.mxu0 0.0
    %264 = vmatpush1.msra.mxu0 0.0
    %265 = vmatprep.subr.mxu0 0.0
    %266 = vmatpush1.msra.mxu0 0.0
    %267 = vmatprep.subr.mxu0 0.0
    %268 = vmatpush1.msra.mxu0 0.0
    %269 = vmatprep.subr.mxu0 0.0
    %270 = vmatpush1.msra.mxu0 0.0
    %271 = vmatprep.subr.mxu0 0.0
    %272 = vmatpush1.msra.mxu0 %v247
    %273 = vmatprep.subr.mxu0 0.0
    %274 = vmatpush1.msra.mxu0 %v235
    %275 = vmatprep.subr.mxu0 0.0
    %276 = vmatpush1.msra.mxu0 %v234
    %277 = vmatprep.subr.mxu0 0.0
    %278 = vmatpush1.msra.mxu0 %v233
    %279 = vmatprep.subr.mxu0 0.0
    %280 = vmatpush1.msra.mxu0 %v232
    %281 = vmatprep.subr.mxu0 0.0
    %282 = vmatpush2.msra.mxu0 0.0
    %283 = vmatprep.subr.mxu0 0.0
    %284 = vmatpush2.msra.mxu0 0.0
    %285 = vmatprep.subr.mxu0 0.0
    %286 = vmatpush2.msra.mxu0 0.0
    %287 = vmatprep.subr.mxu0 0.0
    %288 = vmatpush2.msra.mxu0 0.0
    %289 = vmatprep.subr.mxu0 0.0
    %290 = vmatpush2.msra.mxu0 0.0
    %291 = vmatprep.subr.mxu0 0.0
    %292 = vmatpush2.msra.mxu0 0.0
    %293 = vmatprep.subr.mxu0 0.0
    %294 = vmatpush2.msra.mxu0 0.0
    %295 = vmatprep.subr.mxu0 0.0
    %296 = vmatpush2.msra.mxu0 0.0
    %297 = vmatprep.subr.mxu0 0.0
    %298 = vmatpush2.msra.mxu0 0.0
    %299 = vmatprep.subr.mxu0 0.0
    %300 = vmatpush2.msra.mxu0 0.0
    %301 = vmatprep.subr.mxu0 0.0
    %302 = vmatpush2.msra.mxu0 0.0
    %303 = vmatprep.subr.mxu0 0.0
    %304 = vmatpush2.msra.mxu0 0.0
    %305 = vmatprep.subr.mxu0 0.0
    %306 = vmatpush2.msra.mxu0 0.0
    %307 = vmatprep.subr.mxu0 0.0
    %308 = vmatpush2.msra.mxu0 0.0
    %309 = vmatprep.subr.mxu0 0.0
    %310 = vmatpush2.msra.mxu0 0.0
    %311 = vmatprep.subr.mxu0 0.0
    %312 = vmatpush2.msra.mxu0 0.0
    %313 = vmatprep.mubr.f32.mxu0 0.0
    %314 = vmatmul.mubr.f32.gmra.mxu0 %v243
    %v315 = vpop.f32.mrf.mxu0
    %v316 = vadd.f32 %v240, %v315
    %v317 = vpop.f32.mrf.mxu0
    %318 = vdwg.mxu0
    %vm319 = vcmask 80896
    %v320 = vsel %vm319, %v316, -inf
    %321 = vmax.xlane.f32.xlu0 %v320
    %v322 = vpop.xlane.xlu0 %321
    %v323 = vsub.f32 %v316, %v322
    %v324 = vmul.f32 %v323, 1.442695
    %v325 = vpow.pop %v324
    %v326 = vsel %vm319, %v325, 0.0
    %327 = vadd.xlane.f32.xlu0 %v326
    %v328 = vpop.xlane.xlu0 %327
    %v329 = vrcp.pop %v328
    %v330 = vmul.f32 %v325, %v329
    %331 = vst.msk [vmem:[#allocation2] sm:$0xff] %vm319, %v330
    // Predicated region
    $region22: #{tpu_custom_call.1} parent=1 // pred_check
      _
    $region23: #{tpu_custom_call.1} parent=1 // pred_check_branch
      %333 = sbr.rel (0) target = $region25
    $region24: #{tpu_custom_call.1} parent=1 // pred_region
      _
    $region25: #{tpu_custom_call.1} parent=1 // pred_fallthru
      _
    // Predicated region
    $region26: #{tpu_custom_call.1} parent=1 // pred_check
      _
    $region27: #{tpu_custom_call.1} parent=1 // pred_check_branch
      %335 = sbr.rel (0) target = $region29
    $region28: #{tpu_custom_call.1} parent=1 // pred_region
      %s337 = ssub.s32 128, 128
      %338 = vsyncadd [#allocation3], %s337
      %s340 = sshll.u32 [#allocation2], 4
      %s341 = int_to_ptr.vmem [resolvable:$true] %s340
      %343 = dma.vmem_to_hbm [thread:$0]  %s341, 128, %s6, [#allocation3]
    $region29: #{tpu_custom_call.1} parent=1 // pred_fallthru
      _
    // Predicated region
    $region30: #{tpu_custom_call.1} parent=1 // pred_check
      _
    $region31: #{tpu_custom_call.1} parent=1 // pred_check_branch
      %345 = sbr.rel (0) target = $region33
    $region32: #{tpu_custom_call.1} parent=1 // pred_region
      _
    $region33: #{tpu_custom_call.1} parent=1 // pred_fallthru
      _
    // Predicated region
    $region34: #{tpu_custom_call.1} parent=1 // pred_check
      _
    $region35: #{tpu_custom_call.1} parent=1 // pred_check_branch
      %347 = sbr.rel (0) target = $region37
    $region36: #{tpu_custom_call.1} parent=1 // pred_region
      %348 = dma.done [#allocation3], 128
    $region37: #{tpu_custom_call.1} parent=1 // pred_fallthru
      _
    %349 = vsyncpa [#allocation3], 1

</llo_original>
